<compile_context>
chip_gen: v5e
topology: v5e:2x2
jax: 0.10.0
libtpu: 0.0.40
codegen_flags: <defaults>
</compile_context>

<pallas_src>
import functools

import jax
import jax.numpy as jnp
from jax.experimental import pallas as pl
from jax.experimental.pallas import tpu as pltpu

_LANE = 128      # vreg lane width
_SUBLANE = 8     # f32 sublane count


def _round_up(x, m):
    return (x + m - 1) // m * m


# ------------------------------ Pallas kernel -------------------------------

def _normed_linear_kernel(x_ref, w_ref, o_ref, *, eps):
    """Fused cosine-similarity linear layer.

    x_ref : (TM, Fp)  f32   row tile of the (zero-padded) input
    w_ref : (Fp, Cp)  f32   full (zero-padded) weight
    o_ref : (TM, Cp)  f32   lane-dense output tile
    """
    x = x_ref[...]
    w = w_ref[...]

    # MXU matmul on the un-normalized operands, f32 accumulation.
    acc = jnp.dot(x, w, preferred_element_type=jnp.float32)          # (TM, Cp)

    # Norms (padding rows/cols are zero -> norm 0 -> clamped by eps; their
    # matmul contribution is 0, so 0 * (1/eps) stays exactly 0).
    inv_xn = 1.0 / jnp.maximum(
        jnp.sqrt(jnp.sum(x * x, axis=1, keepdims=True)), eps)        # (TM, 1)
    inv_wn = 1.0 / jnp.maximum(
        jnp.sqrt(jnp.sum(w * w, axis=0, keepdims=True)), eps)        # (1, Cp)

    # Epilogue: scale rows and columns — identical to normalize-then-matmul.
    o_ref[...] = acc * inv_xn * inv_wn


# ------------------------------ wrapper --------------------------------------

def normed_linear(x, weight, *, eps=1e-12, block_rows=256):
    """x: (N, in_features), weight: (in_features, out_features) -> (N, out_features)."""
    n, f = x.shape
    f2, c = weight.shape
    assert f == f2, "in_features mismatch"

    fp = _round_up(f, _LANE)          # lane-dense K
    cp = _round_up(c, _LANE)          # lane-dense output
    n8 = _round_up(n, _SUBLANE)
    tm = n8 if n8 <= block_rows else block_rows
    npad = _round_up(n8, tm)

    xp = jnp.pad(x.astype(jnp.float32), ((0, npad - n), (0, fp - f)))
    wp = jnp.pad(weight.astype(jnp.float32), ((0, fp - f), (0, cp - c)))

    grid = (npad // tm,)
    kernel = functools.partial(_normed_linear_kernel, eps=float(eps))

    out = pl.pallas_call(
        kernel,
        out_shape=jax.ShapeDtypeStruct((npad, cp), jnp.float32),
        grid_spec=pltpu.PrefetchScalarGridSpec(
            num_scalar_prefetch=0,
            grid=grid,
            in_specs=[
                pl.BlockSpec((tm, fp), lambda i: (i, 0)),   # row tile of x
                pl.BlockSpec((fp, cp), lambda i: (0, 0)),   # whole weight, resident
            ],
            out_specs=pl.BlockSpec((tm, cp), lambda i: (i, 0)),
        ),
        compiler_params=pltpu.CompilerParams(
            dimension_semantics=("parallel",),
        ),
        cost_estimate=pl.CostEstimate(
            flops=2 * npad * fp * cp + 2 * npad * fp + 2 * fp * cp + 2 * npad * cp,
            transcendentals=0,
            bytes_accessed=4 * (npad * fp + fp * cp + npad * cp),
        ),
    )(xp, wp)

    return out[:n, :c]


# --------------------------- parameter init ----------------------------------

def init_normed_linear_weight(key, in_features, out_features):
    """Mimics: Tensor(in,out).uniform_(-1,1).renorm_(2, 1, 1e-5).mul_(1e5)."""
    w = jax.random.uniform(key, (in_features, out_features),
                           minval=-1.0, maxval=1.0, dtype=jnp.float32)
    maxnorm = 1e-5
    col_norm = jnp.sqrt(jnp.sum(w * w, axis=0, keepdims=True))
    scale = jnp.where(col_norm > maxnorm, maxnorm / (col_norm + 1e-7), 1.0)
    return (w * scale * 1e5).astype(jnp.float32)


# --------------------------------- main ---------------------------------------

if __name__ == "__main__":
    key = jax.random.PRNGKey(0)
    kx, kw = jax.random.split(key)

    N, F_IN, C_OUT = 16, 64, 10          # NormedLinear(64, 10) as used by the ResNet head
    x = jax.random.normal(kx, (N, F_IN), dtype=jnp.float32)
    w = init_normed_linear_weight(kw, F_IN, C_OUT)

    fwd = jax.jit(normed_linear)
    out = jax.block_until_ready(fwd(x, w))

    # Pure-JAX reference (matches PyTorch F.normalize semantics, eps=1e-12).
    def reference(x, w, eps=1e-12):
        xn = x / jnp.maximum(jnp.linalg.norm(x, axis=1, keepdims=True), eps)
        wn = w / jnp.maximum(jnp.linalg.norm(w, axis=0, keepdims=True), eps)
        return xn @ wn

    expected = reference(x, w)
    assert out.shape == (N, C_OUT)
    assert bool(jnp.all(jnp.isfinite(out)))
    assert bool(jnp.allclose(out, expected, atol=1e-5, rtol=1e-5)), (
        float(jnp.max(jnp.abs(out - expected))))

    print("KERNEL_OK")
</pallas_src>

<mosaic_0001>
module attributes {stable_mosaic.version = 11 : i64} {
  func.func @_normed_linear_kernel(%arg0: i32, %arg1: memref<16x128xf32, #tpu.memory_space<vmem>>, %arg2: memref<128x128xf32, #tpu.memory_space<vmem>>, %arg3: memref<16x128xf32, #tpu.memory_space<vmem>>) attributes {dimension_semantics = [#tpu.dimension_semantics<parallel>], iteration_bounds = array<i64: 1>, scalar_prefetch = 0 : i64, scratch_operands = 0 : i64, tpu.core_type = #tpu.core_type<tc>, window_params = [{transform_indices = @transform_0, window_bounds = array<i64: 16, 128>}, {pipeline_mode = #tpu.pipeline_mode<synchronous>, transform_indices = @transform_1, window_bounds = array<i64: 128, 128>}, {transform_indices = @transform_2, window_bounds = array<i64: 16, 128>}]} {
    %c0 = arith.constant 0 : index
    %c0_0 = arith.constant 0 : index
    %0 = vector.load %arg1[%c0, %c0_0] : memref<16x128xf32, #tpu.memory_space<vmem>>, vector<16x128xf32>
    %c0_1 = arith.constant 0 : index
    %c0_2 = arith.constant 0 : index
    %1 = vector.load %arg2[%c0_1, %c0_2] : memref<128x128xf32, #tpu.memory_space<vmem>>, vector<128x128xf32>
    %cst = arith.constant dense<0.000000e+00> : vector<16x128xf32>
    %2 = tpu.matmul %0, %1, %cst {dimension_numbers = #tpu.dot_dimension_numbers<[1], [0], [0], [1], [0, 0, 1, 1], [], []>} : vector<16x128xf32>, vector<128x128xf32>, vector<16x128xf32> -> vector<16x128xf32>
    %3 = arith.mulf %0, %0 : vector<16x128xf32>
    %cst_3 = arith.constant dense<0.000000e+00> : vector<16xf32>
    %4 = vector.multi_reduction <add>, %3, %cst_3 [1] : vector<16x128xf32> to vector<16xf32>
    %5 = vector.shape_cast %4 : vector<16xf32> to vector<16x1xf32>
    %6 = math.sqrt %5 : vector<16x1xf32>
    %cst_4 = arith.constant 9.99999996E-13 : f32
    %7 = vector.broadcast %cst_4 : f32 to vector<16x1xf32>
    %8 = arith.maximumf %6, %7 : vector<16x1xf32>
    %cst_5 = arith.constant 1.000000e+00 : f32
    %9 = vector.broadcast %cst_5 : f32 to vector<16x1xf32>
    %10 = arith.divf %9, %8 : vector<16x1xf32>
    %11 = arith.mulf %1, %1 : vector<128x128xf32>
    %cst_6 = arith.constant dense<0.000000e+00> : vector<128xf32>
    %12 = vector.multi_reduction <add>, %11, %cst_6 [0] : vector<128x128xf32> to vector<128xf32>
    %13 = vector.shape_cast %12 : vector<128xf32> to vector<1x128xf32>
    %14 = math.sqrt %13 : vector<1x128xf32>
    %cst_7 = arith.constant 9.99999996E-13 : f32
    %15 = vector.broadcast %cst_7 : f32 to vector<1x128xf32>
    %16 = arith.maximumf %14, %15 : vector<1x128xf32>
    %cst_8 = arith.constant 1.000000e+00 : f32
    %17 = vector.broadcast %cst_8 : f32 to vector<1x128xf32>
    %18 = arith.divf %17, %16 : vector<1x128xf32>
    %19 = vector.broadcast %10 : vector<16x1xf32> to vector<16x128xf32>
    %20 = arith.mulf %2, %19 : vector<16x128xf32>
    %21 = vector.broadcast %18 : vector<1x128xf32> to vector<16x128xf32>
    %22 = arith.mulf %20, %21 : vector<16x128xf32>
    %c0_9 = arith.constant 0 : index
    %c0_10 = arith.constant 0 : index
    %23 = vector.load %arg3[%c0_9, %c0_10] : memref<16x128xf32, #tpu.memory_space<vmem>>, vector<16x128xf32>
    tpu.vector_store %arg3[%c0_9, %c0_10], %22 {strides = array<i32>} : memref<16x128xf32, #tpu.memory_space<vmem>>, vector<16x128xf32>,
    return
  }
  func.func @transform_0(%arg0: i32) -> (i32, i32) {
    %c0_i32 = arith.constant 0 : i32
    %c0_i32_0 = arith.constant 0 : i32
    return %arg0, %c0_i32 : i32, i32
  }
  func.func @transform_1(%arg0: i32) -> (i32, i32) {
    %c0_i32 = arith.constant 0 : i32
    %c0_i32_0 = arith.constant 0 : i32
    %c0_i32_1 = arith.constant 0 : i32
    return %c0_i32, %c0_i32_0 : i32, i32
  }
  func.func @transform_2(%arg0: i32) -> (i32, i32) {
    %c0_i32 = arith.constant 0 : i32
    %c0_i32_0 = arith.constant 0 : i32
    return %arg0, %c0_i32 : i32, i32
  }
}

</mosaic_0001>

<llo_original>
// kernel: normed_linear.1
$region0: #{normed_linear.1}
  #allocation0 [shape = 'u32[]', space=smem, size = 0x4, offset = 0x4, fixed_abs, tag = 'smem constant byte address 0x4 - core index']
  #allocation1 [shape = 'u32[72,128]{1,0:T(1,128)}', space=vmem, size = 0x9000, scoped, tag = 'internal scratch']
  %s0 = inlined_call_operand.vmem [shape: f32[16,128], index: 0, kind: input, shape index: {}]
  %s1 = inlined_call_operand.vmem [shape: f32[128,128], index: 1, kind: input, shape index: {}]
  %s2 = inlined_call_operand.hbm [shape: f32[16,128], index: 2, kind: output, shape index: {}]
  %s3 = sld [smem:[#allocation0]]
  $region18: #{normed_linear.1} parent=0
    _
  %s5 = ssub.s32 1, %s3
  %s6 = scalar_select 0, %s5, %s3
  $region1: #{normed_linear.1} parent=0
    #allocation2 [shape = 'u8[8192]{0}', space=vmem, size = 0x2000, scoped, tag = 'output window, operand 0, single buffered']
    #allocation3 [shape = 's32[1]{0}', space=sflag, size = 0x4, scoped, tag = 'scoped memory for normed_linear.1']
    %7 = vsyncpa [#allocation3], 0
    // Predicated region
    $region2: #{normed_linear.1} parent=1 // pred_check
      _
    $region3: #{normed_linear.1} parent=1 // pred_check_branch
      %9 = sbr.rel (0) target = $region5
    $region4: #{normed_linear.1} parent=1 // pred_region
      _
    $region5: #{normed_linear.1} parent=1 // pred_fallthru
      _
    // Predicated region
    $region6: #{normed_linear.1} parent=1 // pred_check
      _
    $region7: #{normed_linear.1} parent=1 // pred_check_branch
      %11 = sbr.rel (0) target = $region9
    $region8: #{normed_linear.1} parent=1 // pred_region
      _
    $region9: #{normed_linear.1} parent=1 // pred_fallthru
      _
    %v12 = vld [vmem:[%s0] sm:$0xff]
    %v13 = vld [vmem:[%s0 + $0x8] sm:$0xff]
    %v14 = vld [vmem:[%s1] sm:$0xff]
    %v15 = vld [vmem:[%s1 + $0x8] sm:$0xff]
    %v16 = vld [vmem:[%s1 + $0x10] sm:$0xff]
    %v17 = vld [vmem:[%s1 + $0x18] sm:$0xff]
    %v18 = vld [vmem:[%s1 + $0x20] sm:$0xff]
    %v19 = vld [vmem:[%s1 + $0x28] sm:$0xff]
    %v20 = vld [vmem:[%s1 + $0x30] sm:$0xff]
    %v21 = vld [vmem:[%s1 + $0x38] sm:$0xff]
    %v22 = vld [vmem:[%s1 + $0x40] sm:$0xff]
    %v23 = vld [vmem:[%s1 + $0x48] sm:$0xff]
    %v24 = vld [vmem:[%s1 + $0x50] sm:$0xff]
    %v25 = vld [vmem:[%s1 + $0x58] sm:$0xff]
    %v26 = vld [vmem:[%s1 + $0x60] sm:$0xff]
    %v27 = vld [vmem:[%s1 + $0x68] sm:$0xff]
    %v28 = vld [vmem:[%s1 + $0x70] sm:$0xff]
    %v29 = vld [vmem:[%s1 + $0x78] sm:$0xff]
    %30 = vmatpush.msra.mxu0 %v29
    %31 = vmatpush.msra.mxu0 %v28
    %32 = vmatpush.msra.mxu0 %v27
    %33 = vmatpush.msra.mxu0 %v26
    %34 = vmatpush.msra.mxu0 %v25
    %35 = vmatpush.msra.mxu0 %v24
    %36 = vmatpush.msra.mxu0 %v23
    %37 = vmatpush.msra.mxu0 %v22
    %38 = vmatpush.msra.mxu0 %v21
    %39 = vmatpush.msra.mxu0 %v20
    %40 = vmatpush.msra.mxu0 %v19
    %41 = vmatpush.msra.mxu0 %v18
    %42 = vmatpush.msra.mxu0 %v17
    %43 = vmatpush.msra.mxu0 %v16
    %44 = vmatpush.msra.mxu0 %v15
    %45 = vmatpush.msra.mxu0 %v14
    %46 = vmatmul.f32.gmra.mxu0 %v12
    %v47 = vpop.f32.mrf.mxu0
    %v48 = vadd.f32 0.0, %v47
    %49 = vmatmul.f32.gmra.mxu0 %v13
    %v50 = vpop.f32.mrf.mxu0
    %v51 = vadd.f32 0.0, %v50
    %52 = vdwg.mxu0
    %v53 = vmul.f32 %v12, %v12
    %v54 = vmul.f32 %v13, %v13
    %55 = vadd.xlane.f32.xlu0 %v53
    %v56 = vpop.xlane.xlu0 %55
    %57 = vadd.xlane.f32.xlu0 %v54
    %v58 = vpop.xlane.xlu0 %57
    %v59 = vrsqrt.pop %v56
    %v60 = vmul.f32 %v59, %v56
    %v61 = vmul.f32 %v60, %v59
    %v62 = vmul.f32 0.5, %v61
    %v63 = vsub.f32 1.5, %v62
    %v64 = vmul.f32 %v59, %v63
    %v65 = vmul.f32 %v56, %v64
    %vm66 = vcmp.eq.f32.partialorder %v56, inf
    %v67 = vsel %vm66, %v56, %v65
    %vm68 = vcmp.eq.f32.partialorder %v56, 0.0
    %v69 = vand.u32 %v56, 2147483648
    %v70 = vsel %vm68, %v69, %v67
    %v71 = vrsqrt.pop %v58
    %v72 = vmul.f32 %v71, %v58
    %v73 = vmul.f32 %v72, %v71
    %v74 = vmul.f32 0.5, %v73
    %v75 = vsub.f32 1.5, %v74
    %v76 = vmul.f32 %v71, %v75
    %v77 = vmul.f32 %v58, %v76
    %vm78 = vcmp.eq.f32.partialorder %v58, inf
    %v79 = vsel %vm78, %v58, %v77
    %vm80 = vcmp.eq.f32.partialorder %v58, 0.0
    %v81 = vand.u32 %v58, 2147483648
    %v82 = vsel %vm80, %v81, %v79
    %v83 = vmax.f32 %v70, 1e-12
    %v84 = vmax.f32 %v82, 1e-12
    %v85 = vrcp.pop %v83
    %v86 = vmul.f32 %v83, %v85
    %v87 = vsub.f32 1.0, %v86
    %v88 = vmul.f32 %v85, %v87
    %v89 = vadd.f32 %v85, %v88
    %vm90 = vweird.f32 %v83
    %vm91 = vweird.f32 %v85
    %vm92 = vmor %vm90, %vm91
    %v93 = vsel %vm92, %v85, %v89
    %v94 = vand.u32 2147483647, %v83
    %vm95 = vcmp.eq.f32.partialorder %v94, 8.507059e+37
    %v96 = vand.u32 %v83, 2147483648
    %v97 = vor.u32 1.1754944e-38, %v96
    %v98 = vsel %vm95, %v97, %v93
    %v99 = vmul.f32 1.0, %v98
    %v100 = vrcp.pop %v84
    %v101 = vmul.f32 %v84, %v100
    %v102 = vsub.f32 1.0, %v101
    %v103 = vmul.f32 %v100, %v102
    %v104 = vadd.f32 %v100, %v103
    %vm105 = vweird.f32 %v84
    %vm106 = vweird.f32 %v100
    %vm107 = vmor %vm105, %vm106
    %v108 = vsel %vm107, %v100, %v104
    %v109 = vand.u32 2147483647, %v84
    %vm110 = vcmp.eq.f32.partialorder %v109, 8.507059e+37
    %v111 = vand.u32 %v84, 2147483648
    %v112 = vor.u32 1.1754944e-38, %v111
    %v113 = vsel %vm110, %v112, %v108
    %v114 = vmul.f32 1.0, %v113
    %v115 = vmul.f32 %v14, %v14
    %v116 = vmul.f32 %v15, %v15
    %v117 = vmul.f32 %v16, %v16
    %v118 = vmul.f32 %v17, %v17
    %v119 = vmul.f32 %v18, %v18
    %v120 = vmul.f32 %v19, %v19
    %v121 = vmul.f32 %v20, %v20
    %v122 = vmul.f32 %v21, %v21
    %v123 = vmul.f32 %v22, %v22
    %v124 = vmul.f32 %v23, %v23
    %v125 = vmul.f32 %v24, %v24
    %v126 = vmul.f32 %v25, %v25
    %v127 = vmul.f32 %v26, %v26
    %v128 = vmul.f32 %v27, %v27
    %v129 = vmul.f32 %v28, %v28
    %v130 = vmul.f32 %v29, %v29
    %v131 = vadd.f32 %v115, %v116
    %v132 = vadd.f32 %v131, %v117
    %v133 = vadd.f32 %v132, %v118
    %v134 = vadd.f32 %v133, %v119
    %v135 = vadd.f32 %v134, %v120
    %v136 = vadd.f32 %v135, %v121
    %v137 = vadd.f32 %v136, %v122
    %v138 = vadd.f32 %v137, %v123
    %v139 = vadd.f32 %v138, %v124
    %v140 = vadd.f32 %v139, %v125
    %v141 = vadd.f32 %v140, %v126
    %v142 = vadd.f32 %v141, %v127
    %v143 = vadd.f32 %v142, %v128
    %v144 = vadd.f32 %v143, %v129
    %v145 = vadd.f32 %v144, %v130
    %v146 = vrot.slane %v145, 4
    %v147 = vadd.f32 %v145, %v146
    %v148 = vrot.slane %v147, 2
    %v149 = vadd.f32 %v147, %v148
    %v150 = vrot.slane %v149, 1
    %v151 = vadd.f32 %v149, %v150
    %v152 = vrsqrt.pop %v151
    %v153 = vmul.f32 %v152, %v151
    %v154 = vmul.f32 %v153, %v152
    %v155 = vmul.f32 0.5, %v154
    %v156 = vsub.f32 1.5, %v155
    %v157 = vmul.f32 %v152, %v156
    %v158 = vmul.f32 %v151, %v157
    %vm159 = vcmp.eq.f32.partialorder %v151, inf
    %v160 = vsel %vm159, %v151, %v158
    %vm161 = vcmp.eq.f32.partialorder %v151, 0.0
    %v162 = vand.u32 %v151, 2147483648
    %v163 = vsel %vm161, %v162, %v160
    %v164 = vmax.f32 %v163, 1e-12
    %v165 = vrcp.pop %v164
    %v166 = vmul.f32 %v164, %v165
    %v167 = vsub.f32 1.0, %v166
    %v168 = vmul.f32 %v165, %v167
    %v169 = vadd.f32 %v165, %v168
    %vm170 = vweird.f32 %v164
    %vm171 = vweird.f32 %v165
    %vm172 = vmor %vm170, %vm171
    %v173 = vsel %vm172, %v165, %v169
    %v174 = vand.u32 2147483647, %v164
    %vm175 = vcmp.eq.f32.partialorder %v174, 8.507059e+37
    %v176 = vand.u32 %v164, 2147483648
    %v177 = vor.u32 1.1754944e-38, %v176
    %v178 = vsel %vm175, %v177, %v173
    %v179 = vmul.f32 1.0, %v178
    %v180 = vmul.f32 %v48, %v99
    %v181 = vmul.f32 %v51, %v114
    %v182 = vmul.f32 %v180, %v179
    %v183 = vmul.f32 %v181, %v179
    %184 = vst [vmem:[#allocation2] sm:$0xff] %v182
    %185 = vst [vmem:[#allocation2 + $0x8] sm:$0xff] %v183
    // Predicated region
    $region10: #{normed_linear.1} parent=1 // pred_check
      _
    $region11: #{normed_linear.1} parent=1 // pred_check_branch
      %187 = sbr.rel (0) target = $region13
    $region12: #{normed_linear.1} parent=1 // pred_region
      %189 = vsyncadd [#allocation3], 0
      %s190 = sshll.u32 [#allocation2], 4
      %s191 = int_to_ptr.vmem [resolvable:$true] %s190
      %s192 = sshll.u32 %s2, 4
      %s193 = int_to_ptr.hbm [resolvable:$true] %s192
      %198 = dma.vmem_to_hbm [thread:$0]  %s191, 256, %s193, [#allocation3], 128, 128, 8
    $region13: #{normed_linear.1} parent=1 // pred_fallthru
      _
    // Predicated region
    $region14: #{normed_linear.1} parent=1 // pred_check
      _
    $region15: #{normed_linear.1} parent=1 // pred_check_branch
      %200 = sbr.rel (0) target = $region17
    $region16: #{normed_linear.1} parent=1 // pred_region
      %202 = dma.done [#allocation3], 256
    $region17: #{normed_linear.1} parent=1 // pred_fallthru
      _
    %203 = vsyncpa [#allocation3], 1

</llo_original>
